<compile_context>
chip_gen: v5e
topology: v5e:2x2
jax: 0.10.0
libtpu: 0.0.40
codegen_flags: <defaults>
</compile_context>

<pallas_src>
import functools

import jax
import jax.numpy as jnp
from jax.experimental import pallas as pl
from jax.experimental.pallas import tpu as pltpu

BN_EPS = 1e-5
LANE = 128            # TPU lane width
BATCH_ALIGN = 16      # bf16 sublane quantum (also satisfies the f32 requirement of 8)
MAX_TILE_B = 2048     # batch tile cap; amortizes per-step overhead to <20%
MXU_DTYPE = jnp.bfloat16   # MXU operand dtype (f32 accumulation)


def _round_up(n, m):
    return ((n + m - 1) // m) * m


def _use_bf16_tanh():
    """bf16 EUP tanh only on v6e/v7x; v5e (and older/unknown) keeps f32."""
    try:
        kind = jax.devices()[0].device_kind.lower()
    except Exception:
        return False
    return ("v6" in kind) or ("v7" in kind)


def embeddingnet_kernel(x_ref, w1_ref, b1_ref, w2_ref, b2_ref, o_ref, *, tanh_bf16):
    # fc1: bf16 MXU operands, f32 accumulate, bias in f32.
    acc = jnp.dot(x_ref[...].astype(w1_ref.dtype), w1_ref[...],
                  preferred_element_type=jnp.float32) + b1_ref[...]
    # Tanh on the EUP: bf16 on v6e/v7x (halves EUP work + removes one pack),
    # f32 on v5e (no bf16 VPU/EUP).
    if tanh_bf16:
        h = jnp.tanh(acc.astype(jnp.bfloat16))
    else:
        h = jnp.tanh(acc).astype(w2_ref.dtype)
    # TODO(synk): train-mode Dropout(0.5) (PyTorch-RNG-matching mask) has no clean
    #             Pallas equivalent; eval-mode identity is implemented instead.
    # fc2 with eval-mode BatchNorm1d folded into w2/b2 by the wrapper.
    y = jnp.dot(h, w2_ref[...], preferred_element_type=jnp.float32) + b2_ref[...]
    # Store only the real embedding columns (padded lanes are provably zero):
    # shrinks the dominant HBM writeback stream by e_pad/emb (8x at emb=16).
    o_ref[...] = y[:, :o_ref.shape[1]].astype(o_ref.dtype)


def fold_and_pad_params(params):
    """Fold eval-mode BN into fc2 and pad feature dims to the 128-lane width."""
    w1, b1 = params["w1"], params["b1"]
    w2, b2 = params["w2"], params["b2"]
    scale = params["gamma"] * jax.lax.rsqrt(params["running_var"] + BN_EPS)
    w2f = w2 * scale                                           # [H, E] * [1, E]
    b2f = (b2 - params["running_mean"]) * scale + params["beta"]

    d_in, hidden = w1.shape
    emb = w2.shape[1]
    h_pad = _round_up(hidden, LANE)
    e_pad = _round_up(emb, LANE)

    w1p = jnp.zeros((d_in, h_pad), jnp.float32).at[:, :hidden].set(w1)
    b1p = jnp.zeros((1, h_pad), jnp.float32).at[:, :hidden].set(b1)
    w2p = jnp.zeros((h_pad, e_pad), jnp.float32).at[:hidden, :emb].set(w2f)
    b2p = jnp.zeros((1, e_pad), jnp.float32).at[:, :emb].set(b2f)

    return {
        "w1": w1p.astype(MXU_DTYPE),   # bf16: MXU-native, halves weight DMA
        "b1": b1p,                     # biases stay f32 (added to f32 accumulator)
        "w2": w2p.astype(MXU_DTYPE),
        "b2": b2p,
    }


def _choose_tiling(B):
    """Pick (tile_b, b_pad, grid): >=2 grid steps when possible (v7x megacore),
    tile <= MAX_TILE_B, multiple of 16, and minimal batch padding."""
    b_al = _round_up(max(B, 1), BATCH_ALIGN)
    if b_al <= BATCH_ALIGN:
        return b_al, b_al, 1
    max_tile = min(MAX_TILE_B, _round_up(pl.cdiv(b_al, 2), BATCH_ALIGN))
    grid = pl.cdiv(b_al, max_tile)
    tile_b = _round_up(pl.cdiv(b_al, grid), BATCH_ALIGN)   # rebalance -> minimal padding
    b_pad = grid * tile_b
    return tile_b, b_pad, grid


def embedding_net_forward(x, kparams, embedding_dim):
    """x: [B, input_dim] (f32 or producer-supplied bf16) -> [B, embedding_dim] f32."""
    B, d_in = x.shape
    h_pad = kparams["w1"].shape[1]
    e_pad = kparams["w2"].shape[1]

    tile_b, b_pad, grid = _choose_tiling(B)
    if b_pad != B:
        x = jnp.pad(x, ((0, b_pad - B), (0, 0)))

    # Explicit VMEM budget: double-buffered x/out tiles + weights + intermediates.
    w_bytes = (kparams["w1"].size * kparams["w1"].dtype.itemsize
               + kparams["w2"].size * kparams["w2"].dtype.itemsize
               + (kparams["b1"].size + kparams["b2"].size) * 4)
    vmem_bytes = (2 * tile_b * d_in * x.dtype.itemsize
                  + 2 * tile_b * embedding_dim * 4
                  + 2 * w_bytes
                  + 3 * tile_b * max(h_pad, e_pad) * 4
                  + (2 << 20))
    vmem_bytes = int(min(max(vmem_bytes, 32 << 20), 64 << 20))

    kernel = functools.partial(embeddingnet_kernel, tanh_bf16=_use_bf16_tanh())

    out = pl.pallas_call(
        kernel,
        out_shape=jax.ShapeDtypeStruct((b_pad, embedding_dim), jnp.float32),
        grid_spec=pltpu.PrefetchScalarGridSpec(
            num_scalar_prefetch=0,
            grid=(grid,),
            in_specs=[
                # activations: tiled over batch (auto double-buffered)
                pl.BlockSpec((tile_b, d_in), lambda i: (i, 0)),
                # weights / biases: constant block index -> VMEM-resident across steps
                pl.BlockSpec((d_in, h_pad), lambda i: (0, 0)),
                pl.BlockSpec((1, h_pad), lambda i: (0, 0)),
                pl.BlockSpec((h_pad, e_pad), lambda i: (0, 0)),
                pl.BlockSpec((1, e_pad), lambda i: (0, 0)),
            ],
            # Output carries only the real embedding columns (last dim == full array dim).
            out_specs=pl.BlockSpec((tile_b, embedding_dim), lambda i: (i, 0)),
        ),
        compiler_params=pltpu.CompilerParams(
            dimension_semantics=("parallel",),   # shard batch across TCs (v7x)
            vmem_limit_bytes=vmem_bytes),
    )(x, kparams["w1"], kparams["b1"], kparams["w2"], kparams["b2"])

    return out[:B] if b_pad != B else out


def init_params(key, input_dim, embedding_dim):
    hidden = embedding_dim * 2
    k1, k2, k3, k4, k5, k6 = jax.random.split(key, 6)
    # PyTorch nn.Linear default init: U(-1/sqrt(fan_in), 1/sqrt(fan_in)).
    bound1 = 1.0 / (input_dim ** 0.5)
    bound2 = 1.0 / (hidden ** 0.5)
    return {
        # stored as [in, out] (PyTorch weight transposed)
        "w1": jax.random.uniform(k1, (input_dim, hidden), jnp.float32, -bound1, bound1),
        "b1": jax.random.uniform(k2, (1, hidden), jnp.float32, -bound1, bound1),
        "w2": jax.random.uniform(k3, (hidden, embedding_dim), jnp.float32, -bound2, bound2),
        "b2": jax.random.uniform(k4, (1, embedding_dim), jnp.float32, -bound2, bound2),
        # BatchNorm1d affine params (PyTorch default gamma=1, beta=0) and
        # deterministic non-trivial running stats so BN does real work.
        "gamma": jnp.ones((1, embedding_dim), jnp.float32),
        "beta": jnp.zeros((1, embedding_dim), jnp.float32),
        "running_mean": 0.1 * jax.random.normal(k5, (1, embedding_dim), jnp.float32),
        "running_var": 1.0 + 0.1 * jax.random.uniform(k6, (1, embedding_dim), jnp.float32),
    }


def reference_forward_f32(x, p):
    """Exact eval-mode PyTorch semantics in f32."""
    h = jnp.tanh(x @ p["w1"] + p["b1"])
    y = h @ p["w2"] + p["b2"]
    return (y - p["running_mean"]) * jax.lax.rsqrt(
        p["running_var"] + BN_EPS) * p["gamma"] + p["beta"]


def reference_forward_kernel_math(x, p, tanh_bf16):
    """Same BN-folded / bf16-operand (and generation-gated tanh) math as the kernel."""
    scale = p["gamma"] * jax.lax.rsqrt(p["running_var"] + BN_EPS)
    w1 = p["w1"].astype(MXU_DTYPE)
    w2 = (p["w2"] * scale).astype(MXU_DTYPE)
    b2 = (p["b2"] - p["running_mean"]) * scale + p["beta"]
    acc = jnp.dot(x.astype(MXU_DTYPE), w1,
                  preferred_element_type=jnp.float32) + p["b1"]
    if tanh_bf16:
        h = jnp.tanh(acc.astype(jnp.bfloat16))
    else:
        h = jnp.tanh(acc).astype(MXU_DTYPE)
    return jnp.dot(h, w2, preferred_element_type=jnp.float32) + b2


if __name__ == "__main__":
    key = jax.random.PRNGKey(0)
    kx, kp = jax.random.split(key)

    batch = 8
    input_dim = 32
    embedding_dim = 16

    x = jax.random.normal(kx, (batch, input_dim), jnp.float32)
    params = init_params(kp, input_dim, embedding_dim)
    kparams = fold_and_pad_params(params)

    out = embedding_net_forward(x, kparams, embedding_dim)
    out = jax.block_until_ready(out)
    assert out.shape == (batch, embedding_dim)

    # Tight check against a reference doing identical (BN-folded, bf16, gated-tanh) math.
    ref_kernel_math = reference_forward_kernel_math(x, params, _use_bf16_tanh())
    assert jnp.allclose(out, ref_kernel_math, atol=1e-3, rtol=1e-3)

    # Looser check against the exact f32 PyTorch semantics (bf16 operand rounding).
    ref_f32 = reference_forward_f32(x, params)
    assert jnp.allclose(out, ref_f32, atol=5e-2, rtol=5e-2)

    print("KERNEL_OK")
</pallas_src>

<mosaic_0001>
module attributes {stable_mosaic.version = 11 : i64} {
  func.func @embeddingnet_kernel(%arg0: i32, %arg1: memref<16x32xf32, #tpu.memory_space<vmem>>, %arg2: memref<32x128xbf16, #tpu.memory_space<vmem>>, %arg3: memref<1x128xf32, #tpu.memory_space<vmem>>, %arg4: memref<128x128xbf16, #tpu.memory_space<vmem>>, %arg5: memref<1x128xf32, #tpu.memory_space<vmem>>, %arg6: memref<16x16xf32, #tpu.memory_space<vmem>>) attributes {dimension_semantics = [#tpu.dimension_semantics<parallel>], iteration_bounds = array<i64: 1>, scalar_prefetch = 0 : i64, scratch_operands = 0 : i64, tpu.core_type = #tpu.core_type<tc>, window_params = [{transform_indices = @transform_0, window_bounds = array<i64: 16, 32>}, {pipeline_mode = #tpu.pipeline_mode<synchronous>, transform_indices = @transform_1, window_bounds = array<i64: 32, 128>}, {pipeline_mode = #tpu.pipeline_mode<synchronous>, transform_indices = @transform_2, window_bounds = array<i64: 1, 128>}, {pipeline_mode = #tpu.pipeline_mode<synchronous>, transform_indices = @transform_3, window_bounds = array<i64: 128, 128>}, {pipeline_mode = #tpu.pipeline_mode<synchronous>, transform_indices = @transform_4, window_bounds = array<i64: 1, 128>}, {transform_indices = @transform_5, window_bounds = array<i64: 16, 16>}]} {
    %c0 = arith.constant 0 : index
    %c0_0 = arith.constant 0 : index
    %0 = vector.load %arg1[%c0, %c0_0] : memref<16x32xf32, #tpu.memory_space<vmem>>, vector<16x32xf32>
    %1 = arith.truncf %0 : vector<16x32xf32> to vector<16x32xbf16>
    %c0_1 = arith.constant 0 : index
    %c0_2 = arith.constant 0 : index
    %2 = vector.load %arg2[%c0_1, %c0_2] : memref<32x128xbf16, #tpu.memory_space<vmem>>, vector<32x128xbf16>
    %cst = arith.constant dense<0.000000e+00> : vector<16x128xf32>
    %3 = tpu.matmul %1, %2, %cst {dimension_numbers = #tpu.dot_dimension_numbers<[1], [0], [0], [1], [0, 0, 1, 1], [], []>} : vector<16x32xbf16>, vector<32x128xbf16>, vector<16x128xf32> -> vector<16x128xf32>
    %c0_3 = arith.constant 0 : index
    %c0_4 = arith.constant 0 : index
    %4 = vector.load %arg3[%c0_3, %c0_4] : memref<1x128xf32, #tpu.memory_space<vmem>>, vector<1x128xf32>
    %5 = vector.broadcast %4 : vector<1x128xf32> to vector<16x128xf32>
    %6 = arith.addf %3, %5 : vector<16x128xf32>
    %7 = math.tanh %6 : vector<16x128xf32>
    %8 = arith.truncf %7 : vector<16x128xf32> to vector<16x128xbf16>
    %c0_5 = arith.constant 0 : index
    %c0_6 = arith.constant 0 : index
    %9 = vector.load %arg4[%c0_5, %c0_6] : memref<128x128xbf16, #tpu.memory_space<vmem>>, vector<128x128xbf16>
    %cst_7 = arith.constant dense<0.000000e+00> : vector<16x128xf32>
    %10 = tpu.matmul %8, %9, %cst_7 {dimension_numbers = #tpu.dot_dimension_numbers<[1], [0], [0], [1], [0, 0, 1, 1], [], []>} : vector<16x128xbf16>, vector<128x128xbf16>, vector<16x128xf32> -> vector<16x128xf32>
    %c0_8 = arith.constant 0 : index
    %c0_9 = arith.constant 0 : index
    %11 = vector.load %arg5[%c0_8, %c0_9] : memref<1x128xf32, #tpu.memory_space<vmem>>, vector<1x128xf32>
    %12 = vector.broadcast %11 : vector<1x128xf32> to vector<16x128xf32>
    %13 = arith.addf %10, %12 : vector<16x128xf32>
    %14 = vector.extract_strided_slice %13 {offsets = [0, 0], sizes = [16, 16], strides = [1, 1]} : vector<16x128xf32> to vector<16x16xf32>
    %c0_10 = arith.constant 0 : index
    %c0_11 = arith.constant 0 : index
    %15 = vector.load %arg6[%c0_10, %c0_11] : memref<16x16xf32, #tpu.memory_space<vmem>>, vector<16x16xf32>
    tpu.vector_store %arg6[%c0_10, %c0_11], %14 {strides = array<i32>} : memref<16x16xf32, #tpu.memory_space<vmem>>, vector<16x16xf32>,
    return
  }
  func.func @transform_0(%arg0: i32) -> (i32, i32) {
    %c0_i32 = arith.constant 0 : i32
    %c0_i32_0 = arith.constant 0 : i32
    return %arg0, %c0_i32 : i32, i32
  }
  func.func @transform_1(%arg0: i32) -> (i32, i32) {
    %c0_i32 = arith.constant 0 : i32
    %c0_i32_0 = arith.constant 0 : i32
    %c0_i32_1 = arith.constant 0 : i32
    return %c0_i32, %c0_i32_0 : i32, i32
  }
  func.func @transform_2(%arg0: i32) -> (i32, i32) {
    %c0_i32 = arith.constant 0 : i32
    %c0_i32_0 = arith.constant 0 : i32
    %c0_i32_1 = arith.constant 0 : i32
    return %c0_i32, %c0_i32_0 : i32, i32
  }
  func.func @transform_3(%arg0: i32) -> (i32, i32) {
    %c0_i32 = arith.constant 0 : i32
    %c0_i32_0 = arith.constant 0 : i32
    %c0_i32_1 = arith.constant 0 : i32
    return %c0_i32, %c0_i32_0 : i32, i32
  }
  func.func @transform_4(%arg0: i32) -> (i32, i32) {
    %c0_i32 = arith.constant 0 : i32
    %c0_i32_0 = arith.constant 0 : i32
    %c0_i32_1 = arith.constant 0 : i32
    return %c0_i32, %c0_i32_0 : i32, i32
  }
  func.func @transform_5(%arg0: i32) -> (i32, i32) {
    %c0_i32 = arith.constant 0 : i32
    %c0_i32_0 = arith.constant 0 : i32
    return %arg0, %c0_i32 : i32, i32
  }
}

</mosaic_0001>

<llo_original>
// kernel: tpu_custom_call.1
$region0: #{tpu_custom_call.1}
  #allocation0 [shape = 'u32[]', space=smem, size = 0x4, offset = 0x4, fixed_abs, tag = 'smem constant byte address 0x4 - core index']
  #allocation1 [shape = 'u32[72,128]{1,0:T(1,128)}', space=vmem, size = 0x9000, scoped, tag = 'internal scratch']
  %s0 = inlined_call_operand.hbm [shape: f32[16,32], index: 0, kind: input, shape index: {}]
  %s1 = inlined_call_operand.hbm [shape: bf16[32,128], index: 1, kind: input, shape index: {}]
  %s2 = inlined_call_operand.vmem [shape: f32[1,128], index: 2, kind: input, shape index: {}]
  %s3 = inlined_call_operand.hbm [shape: bf16[128,128], index: 3, kind: input, shape index: {}]
  %s4 = inlined_call_operand.vmem [shape: f32[1,128], index: 4, kind: input, shape index: {}]
  %s5 = inlined_call_operand.hbm [shape: f32[16,16], index: 5, kind: output, shape index: {}]
  %s6 = sld [smem:[#allocation0]]
  $region42: #{tpu_custom_call.1} parent=0
    _
  %s8 = ssub.s32 1, %s6
  %s9 = scalar_select 0, %s8, %s6
  $region1: #{tpu_custom_call.1} parent=0
    #allocation2 [shape = 'u8[8192]{0}', space=vmem, size = 0x2000, scoped, tag = 'input window, operand 0, single buffered']
    #allocation3 [shape = 's32[1]{0}', space=sflag, size = 0x4, scoped, tag = 'scoped memory for tpu_custom_call.1']
    #allocation4 [shape = 's32[1]{0}', space=sflag, size = 0x4, scoped, tag = 'scoped memory for tpu_custom_call.1']
    #allocation5 [shape = 'u8[8192]{0}', space=vmem, size = 0x2000, scoped, tag = 'input window, operand 1, single buffered']
    #allocation6 [shape = 's32[1]{0}', space=sflag, size = 0x4, scoped, tag = 'scoped memory for tpu_custom_call.1']
    #allocation7 [shape = 'u8[32768]{0}', space=vmem, size = 0x8000, scoped, tag = 'input window, operand 3, single buffered']
    #allocation8 [shape = 'u8[8192]{0}', space=vmem, size = 0x2000, scoped, tag = 'output window, operand 0, single buffered']
    %10 = vsyncpa [#allocation3], 0
    %11 = vsyncpa [#allocation6], 0
    %12 = vsyncpa [#allocation4], 0
    // Predicated region
    $region2: #{tpu_custom_call.1} parent=1 // pred_check
      _
    $region3: #{tpu_custom_call.1} parent=1 // pred_check_branch
      %14 = sbr.rel (0) target = $region5
    $region4: #{tpu_custom_call.1} parent=1 // pred_region
      %16 = vsyncadd [#allocation3], 0
      %s17 = sshll.u32 %s0, 4
      %s18 = int_to_ptr.hbm [resolvable:$true] %s17
      %s19 = sshll.u32 [#allocation2], 4
      %s20 = int_to_ptr.vmem [resolvable:$true] %s19
      %25 = dma.hbm_to_vmem [thread:$0]  %s18, 256, %s20, [#allocation3], 128, 128, 8
    $region5: #{tpu_custom_call.1} parent=1 // pred_fallthru
      _
    // Predicated region
    $region6: #{tpu_custom_call.1} parent=1 // pred_check
      _
    $region7: #{tpu_custom_call.1} parent=1 // pred_check_branch
      %27 = sbr.rel (0) target = $region9
    $region8: #{tpu_custom_call.1} parent=1 // pred_region
      %29 = vsyncadd [#allocation6], 0
      %s30 = sshll.u32 %s1, 4
      %s31 = int_to_ptr.hbm [resolvable:$true] %s30
      %s32 = sshll.u32 [#allocation5], 4
      %s33 = int_to_ptr.vmem [resolvable:$true] %s32
      %38 = dma.hbm_to_vmem [thread:$0]  %s31, 256, %s33, [#allocation6], 64, 64, 4
    $region9: #{tpu_custom_call.1} parent=1 // pred_fallthru
      _
    // Predicated region
    $region10: #{tpu_custom_call.1} parent=1 // pred_check
      _
    $region11: #{tpu_custom_call.1} parent=1 // pred_check_branch
      %40 = sbr.rel (0) target = $region13
    $region12: #{tpu_custom_call.1} parent=1 // pred_region
      _
    $region13: #{tpu_custom_call.1} parent=1 // pred_fallthru
      _
    // Predicated region
    $region14: #{tpu_custom_call.1} parent=1 // pred_check
      _
    $region15: #{tpu_custom_call.1} parent=1 // pred_check_branch
      %42 = sbr.rel (0) target = $region17
    $region16: #{tpu_custom_call.1} parent=1 // pred_region
      %44 = vsyncadd [#allocation6], 0
      %s45 = sshll.u32 %s3, 4
      %s46 = int_to_ptr.hbm [resolvable:$true] %s45
      %s47 = sshll.u32 [#allocation7], 4
      %s48 = int_to_ptr.vmem [resolvable:$true] %s47
      %53 = dma.hbm_to_vmem [thread:$0]  %s46, 1024, %s48, [#allocation6], 64, 64, 4
    $region17: #{tpu_custom_call.1} parent=1 // pred_fallthru
      _
    // Predicated region
    $region18: #{tpu_custom_call.1} parent=1 // pred_check
      _
    $region19: #{tpu_custom_call.1} parent=1 // pred_check_branch
      %55 = sbr.rel (0) target = $region21
    $region20: #{tpu_custom_call.1} parent=1 // pred_region
      _
    $region21: #{tpu_custom_call.1} parent=1 // pred_fallthru
      _
    // Predicated region
    $region22: #{tpu_custom_call.1} parent=1 // pred_check
      _
    $region23: #{tpu_custom_call.1} parent=1 // pred_check_branch
      %57 = sbr.rel (0) target = $region25
    $region24: #{tpu_custom_call.1} parent=1 // pred_region
      %59 = dma.done [#allocation3], 256
    $region25: #{tpu_custom_call.1} parent=1 // pred_fallthru
      _
    // Predicated region
    $region26: #{tpu_custom_call.1} parent=1 // pred_check
      _
    $region27: #{tpu_custom_call.1} parent=1 // pred_check_branch
      %61 = sbr.rel (0) target = $region29
    $region28: #{tpu_custom_call.1} parent=1 // pred_region
      %63 = dma.done [#allocation6], 256
    $region29: #{tpu_custom_call.1} parent=1 // pred_fallthru
      _
    // Predicated region
    $region30: #{tpu_custom_call.1} parent=1 // pred_check
      _
    $region31: #{tpu_custom_call.1} parent=1 // pred_check_branch
      %65 = sbr.rel (0) target = $region33
    $region32: #{tpu_custom_call.1} parent=1 // pred_region
      %67 = dma.done [#allocation6], 1024
    $region33: #{tpu_custom_call.1} parent=1 // pred_fallthru
      _
    %v69 = vld [vmem:[#allocation2] sm:$0xff]
    %v70 = vld [vmem:[#allocation2 + $0x8] sm:$0xff]
    %v71 = vpack.c.bf16 %v70, %v69
    %v72 = vld [vmem:[#allocation5] sm:$0xf]
    %v73 = vld [vmem:[#allocation5 + $0x4] sm:$0xf]
    %v74 = vld [vmem:[#allocation5 + $0x8] sm:$0xf]
    %v75 = vld [vmem:[#allocation5 + $0xc] sm:$0xf]
    %v76 = vld [vmem:[%s2] sm:$0x1]
    %v78 = vperm.slane %v76, 0
    %v84 = vunpack.c.l.b16 %v72
    %v85 = vunpack.c.l.b16 %v73
    %v86 = vunpack.c.l.b16 %v74
    %v87 = vunpack.c.l.b16 %v75
    %v88 = vpack.c.b16 %v85, %v84
    %v89 = vpack.c.b16 %v87, %v86
    %vm92 = vcmask 261120
    %v94 = vsel %vm92, %v71, 0
    %96 = vmatpush.bf16.msra.mxu0 0
    %97 = vmatpush.bf16.msra.mxu0 0
    %98 = vmatpush.bf16.msra.mxu0 0
    %99 = vmatpush.bf16.msra.mxu0 0
    %100 = vmatpush.bf16.msra.mxu0 0
    %101 = vmatpush.bf16.msra.mxu0 0
    %102 = vmatpush.bf16.msra.mxu0 %v89
    %103 = vmatpush.bf16.msra.mxu0 %v88
    %104 = vmatmul.bf16.gmra.mxu0 %v94
    %v105 = vpop.f32.mrf.mxu0
    %v106 = vadd.f32 %v78, %v105
    %v107 = vpop.f32.mrf.mxu0
    %v108 = vadd.f32 %v78, %v107
    %109 = vdwg.mxu0
    %v110 = vtanh.pop %v106
    %v111 = vtanh.pop %v108
    %v112 = vpack.c.bf16 %v111, %v110
    %v113 = vld [vmem:[#allocation7] sm:$0xf]
    %v114 = vld [vmem:[#allocation7 + $0x4] sm:$0xf]
    %v115 = vld [vmem:[#allocation7 + $0x8] sm:$0xf]
    %v116 = vld [vmem:[#allocation7 + $0xc] sm:$0xf]
    %v117 = vld [vmem:[#allocation7 + $0x10] sm:$0xf]
    %v118 = vld [vmem:[#allocation7 + $0x14] sm:$0xf]
    %v119 = vld [vmem:[#allocation7 + $0x18] sm:$0xf]
    %v120 = vld [vmem:[#allocation7 + $0x1c] sm:$0xf]
    %v121 = vld [vmem:[#allocation7 + $0x20] sm:$0xf]
    %v122 = vld [vmem:[#allocation7 + $0x24] sm:$0xf]
    %v123 = vld [vmem:[#allocation7 + $0x28] sm:$0xf]
    %v124 = vld [vmem:[#allocation7 + $0x2c] sm:$0xf]
    %v125 = vld [vmem:[#allocation7 + $0x30] sm:$0xf]
    %v126 = vld [vmem:[#allocation7 + $0x34] sm:$0xf]
    %v127 = vld [vmem:[#allocation7 + $0x38] sm:$0xf]
    %v128 = vld [vmem:[#allocation7 + $0x3c] sm:$0xf]
    %v129 = vld [vmem:[%s4] sm:$0x1]
    %v131 = vperm.slane %v129, 0
    %v149 = vunpack.c.l.b16 %v113
    %v150 = vunpack.c.l.b16 %v114
    %v151 = vunpack.c.l.b16 %v115
    %v152 = vunpack.c.l.b16 %v116
    %v153 = vunpack.c.l.b16 %v117
    %v154 = vunpack.c.l.b16 %v118
    %v155 = vunpack.c.l.b16 %v119
    %v156 = vunpack.c.l.b16 %v120
    %v157 = vunpack.c.l.b16 %v121
    %v158 = vunpack.c.l.b16 %v122
    %v159 = vunpack.c.l.b16 %v123
    %v160 = vunpack.c.l.b16 %v124
    %v161 = vunpack.c.l.b16 %v125
    %v162 = vunpack.c.l.b16 %v126
    %v163 = vunpack.c.l.b16 %v127
    %v164 = vunpack.c.l.b16 %v128
    %v165 = vpack.c.b16 %v150, %v149
    %v166 = vpack.c.b16 %v152, %v151
    %v167 = vpack.c.b16 %v154, %v153
    %v168 = vpack.c.b16 %v156, %v155
    %v169 = vpack.c.b16 %v158, %v157
    %v170 = vpack.c.b16 %v160, %v159
    %v171 = vpack.c.b16 %v162, %v161
    %v172 = vpack.c.b16 %v164, %v163
    %181 = vmatpush.bf16.msra.mxu0 %v172
    %182 = vmatpush.bf16.msra.mxu0 %v171
    %183 = vmatpush.bf16.msra.mxu0 %v170
    %184 = vmatpush.bf16.msra.mxu0 %v169
    %185 = vmatpush.bf16.msra.mxu0 %v168
    %186 = vmatpush.bf16.msra.mxu0 %v167
    %187 = vmatpush.bf16.msra.mxu0 %v166
    %188 = vmatpush.bf16.msra.mxu0 %v165
    %189 = vmatmul.bf16.gmra.mxu0 %v112
    %v190 = vpop.f32.mrf.mxu0
    %v191 = vadd.f32 %v131, %v190
    %v192 = vpop.f32.mrf.mxu0
    %v193 = vadd.f32 %v131, %v192
    %194 = vdwg.mxu0
    %vm195 = vcmask 130048
    %196 = vst.msk [vmem:[#allocation8] sm:$0xff] %vm195, %v191
    %197 = vst.msk [vmem:[#allocation8 + $0x8] sm:$0xff] %vm195, %v193
    // Predicated region
    $region34: #{tpu_custom_call.1} parent=1 // pred_check
      _
    $region35: #{tpu_custom_call.1} parent=1 // pred_check_branch
      %199 = sbr.rel (0) target = $region37
    $region36: #{tpu_custom_call.1} parent=1 // pred_region
      %201 = vsyncadd [#allocation4], 0
      %s202 = sshll.u32 [#allocation8], 4
      %s203 = int_to_ptr.vmem [resolvable:$true] %s202
      %s204 = sshll.u32 %s5, 4
      %s205 = int_to_ptr.hbm [resolvable:$true] %s204
      %210 = dma.vmem_to_hbm [thread:$0]  %s203, 256, %s205, [#allocation4], 128, 128, 8
    $region37: #{tpu_custom_call.1} parent=1 // pred_fallthru
      _
    // Predicated region
    $region38: #{tpu_custom_call.1} parent=1 // pred_check
      _
    $region39: #{tpu_custom_call.1} parent=1 // pred_check_branch
      %212 = sbr.rel (0) target = $region41
    $region40: #{tpu_custom_call.1} parent=1 // pred_region
      %214 = dma.done [#allocation4], 256
    $region41: #{tpu_custom_call.1} parent=1 // pred_fallthru
      _
    %215 = vsyncpa [#allocation3], 1
    %216 = vsyncpa [#allocation6], 1
    %217 = vsyncpa [#allocation4], 1

</llo_original>
